<compile_context>
chip_gen: v7x
topology: tpu7x:2x2x1
jax: 0.10.0
libtpu: 0.0.40
codegen_flags: <defaults>
</compile_context>

<pallas_src>
import math

import jax
import jax.numpy as jnp
from jax.experimental import pallas as pl
from jax.experimental.pallas import tpu as pltpu

LANE = 128


def _round_up(x, m):
    return ((x + m - 1) // m) * m


def actor_mlp_kernel(x_ref, w1_ref, b1_ref, w2_ref, b2_ref, w3_ref, b3_ref, o_ref):
    """One batch tile of the actor forward pass, fully fused in VMEM.

    x_ref arrives already in bf16 (cast fused into the wrapper's pad).
    Each dot accumulates in f32; bias add / ReLU / tanh run in f32.
    """
    h1 = jnp.dot(x_ref[...], w1_ref[...],
                 preferred_element_type=jnp.float32) + b1_ref[...]
    h1 = jnp.maximum(h1, 0.0)
    h2 = jnp.dot(h1.astype(jnp.bfloat16), w2_ref[...],
                 preferred_element_type=jnp.float32) + b2_ref[...]
    h2 = jnp.maximum(h2, 0.0)
    h3 = jnp.dot(h2.astype(jnp.bfloat16), w3_ref[...],
                 preferred_element_type=jnp.float32) + b3_ref[...]
    o_ref[...] = jnp.tanh(h3)


def prepare_params(params):
    """Zero-pad all feature dims to multiples of 128 and cast weights to bf16.

    Padding is exact: padded weight rows/cols and bias entries are zero, so
    padded hidden units carry 0 through ReLU and padded output columns are
    tanh(0) = 0, which the wrapper slices away.
    """
    w1, b1, w2, b2, w3, b3 = params

    def pad_w(w):
        i, o = w.shape
        ip, op = _round_up(i, LANE), _round_up(o, LANE)
        return jnp.pad(w, ((0, ip - i), (0, op - o))).astype(jnp.bfloat16)

    def pad_b(b):
        o = b.shape[1]
        return jnp.pad(b, ((0, 0), (0, _round_up(o, LANE) - o))).astype(jnp.float32)

    return (pad_w(w1), pad_b(b1), pad_w(w2), pad_b(b2), pad_w(w3), pad_b(b3))


def actor_forward(state, padded_params, out_dim):
    """state: (B, input_dim) f32 -> (B, out_dim) f32."""
    w1, b1, w2, b2, w3, b3 = padded_params
    batch, din = state.shape
    din_p, h1_p = w1.shape
    h2_p = w2.shape[1]
    dout_p = w3.shape[1]

    # ---- Batch tile / grid selection (perf review) ----------------------
    #  * divisor-based step count keeps batch padding to < one tile of slack
    #    (no 2x zero-row blowups for e.g. batch=513),
    #  * force >=2 grid steps when the batch allows so the "parallel" axis
    #    shards across v7x's two TensorCores (harmless on v5e/v6e),
    #  * cap at 1024 rows: fewer grid steps -> less fixed per-step overhead,
    #    still only a few MiB of VMEM per step at these padded widths,
    #  * tiles are multiples of 16 rows (bf16 sublane packing).
    CAP = 1024
    SUB = 16
    n_steps = pl.cdiv(batch, CAP)
    if batch >= 2 * SUB:
        n_steps = max(n_steps, 2)
    tb = _round_up(pl.cdiv(max(batch, 1), n_steps), SUB)
    batch_p = _round_up(batch, tb)
    grid = (batch_p // tb,)

    # bf16 activations: halves the only recurring HBM->VMEM stream.  Padding
    # rows/cols are exact zeros and get sliced away below.
    x = jnp.pad(state.astype(jnp.bfloat16),
                ((0, batch_p - batch), (0, din_p - din)))

    # Advisory cost estimate on *real* (unpadded) work so XLA's scheduler is
    # not overstated (hidden widths are already 128-multiples for this model).
    cost = pl.CostEstimate(
        flops=2 * batch * (din * h1_p + h1_p * h2_p + h2_p * out_dim),
        transcendentals=batch * out_dim,
        bytes_accessed=(batch * din * 2 + batch * out_dim * 4
                        + (w1.size + w2.size + w3.size) * 2
                        + (b1.size + b2.size + b3.size) * 4),
    )

    out = pl.pallas_call(
        actor_mlp_kernel,
        out_shape=jax.ShapeDtypeStruct((batch_p, dout_p), jnp.float32),
        grid=grid,
        in_specs=[
            pl.BlockSpec((tb, din_p), lambda i: (i, 0)),     # activations: tiled over batch
            pl.BlockSpec((din_p, h1_p), lambda i: (0, 0)),   # weights/biases: VMEM-resident
            pl.BlockSpec((1, h1_p), lambda i: (0, 0)),
            pl.BlockSpec((h1_p, h2_p), lambda i: (0, 0)),
            pl.BlockSpec((1, h2_p), lambda i: (0, 0)),
            pl.BlockSpec((h2_p, dout_p), lambda i: (0, 0)),
            pl.BlockSpec((1, dout_p), lambda i: (0, 0)),
        ],
        out_specs=pl.BlockSpec((tb, dout_p), lambda i: (i, 0)),
        compiler_params=pltpu.CompilerParams(
            dimension_semantics=("parallel",),  # megacore sharding on v7x
        ),
        cost_estimate=cost,
    )(x, w1, b1, w2, b2, w3, b3)

    return out[:batch, :out_dim]


def init_params(key, input_dim, outputs_count, hidden_count):
    """Deterministic init mirroring the PyTorch module:
    - layer0/layer2 weights: xavier_uniform
    - layer4 weight: uniform(-0.3, 0.3)
    - biases: PyTorch Linear default uniform(-1/sqrt(fan_in), 1/sqrt(fan_in))
    Weights are returned already transposed to (in, out), f32, unpadded.
    """
    h2 = hidden_count // 2
    k = jax.random.split(key, 6)

    def xavier(kk, fan_in, fan_out):
        bound = math.sqrt(6.0 / (fan_in + fan_out))
        return jax.random.uniform(kk, (fan_in, fan_out), jnp.float32, -bound, bound)

    def bias(kk, fan_in, fan_out):
        bound = 1.0 / math.sqrt(fan_in)
        return jax.random.uniform(kk, (1, fan_out), jnp.float32, -bound, bound)

    w1 = xavier(k[0], input_dim, hidden_count)
    b1 = bias(k[1], input_dim, hidden_count)
    w2 = xavier(k[2], hidden_count, h2)
    b2 = bias(k[3], hidden_count, h2)
    w3 = jax.random.uniform(k[4], (h2, outputs_count), jnp.float32, -0.3, 0.3)
    b3 = bias(k[5], h2, outputs_count)
    return (w1, b1, w2, b2, w3, b3)


def reference_forward(state, params, matmul_dtype=jnp.float32):
    """Pure-JAX reference (f32 params).  matmul_dtype=bf16 emulates the
    kernel's MXU operand precision for a tight numerical check."""
    w1, b1, w2, b2, w3, b3 = params

    def mm(a, w):
        return jnp.dot(a.astype(matmul_dtype), w.astype(matmul_dtype),
                       preferred_element_type=jnp.float32)

    h1 = jnp.maximum(mm(state, w1) + b1, 0.0)
    h2 = jnp.maximum(mm(h1, w2) + b2, 0.0)
    return jnp.tanh(mm(h2, w3) + b3)


if __name__ == "__main__":
    # HalfCheetah-like actor: 17-dim observation, 6-dim action, module-default
    # hidden_count=256 (-> 256/128 hidden widths).  batch=32 exercises the
    # 2-step batch grid (v7x megacore path) with 16-row bf16 tiles.
    batch = 32
    input_dim = 17
    outputs_count = 6
    hidden_count = 256

    key = jax.random.PRNGKey(0)
    k_params, k_state = jax.random.split(key)
    params = init_params(k_params, input_dim, outputs_count, hidden_count)
    padded_params = prepare_params(params)
    state = jax.random.normal(k_state, (batch, input_dim), jnp.float32)

    out = actor_forward(state, padded_params, outputs_count)
    out = jax.block_until_ready(out)
    assert out.shape == (batch, outputs_count)

    # Tight check against a reference using the same bf16-operand / f32-accum
    # matmul precision as the kernel.
    ref_bf16 = reference_forward(state, params, matmul_dtype=jnp.bfloat16)
    assert jnp.allclose(out, ref_bf16, atol=2e-3, rtol=2e-3)

    # Loose sanity check against the full-f32 PyTorch-equivalent forward.
    ref_f32 = reference_forward(state, params, matmul_dtype=jnp.float32)
    assert jnp.allclose(out, ref_f32, atol=5e-2, rtol=5e-2)

    print("KERNEL_OK")
</pallas_src>

<mosaic_0001>
module attributes {stable_mosaic.version = 11 : i64} {
  func.func @actor_mlp_kernel(%arg0: i32, %arg1: memref<16x128xbf16, #tpu.memory_space<vmem>>, %arg2: memref<128x256xbf16, #tpu.memory_space<vmem>>, %arg3: memref<1x256xf32, #tpu.memory_space<vmem>>, %arg4: memref<256x128xbf16, #tpu.memory_space<vmem>>, %arg5: memref<1x128xf32, #tpu.memory_space<vmem>>, %arg6: memref<128x128xbf16, #tpu.memory_space<vmem>>, %arg7: memref<1x128xf32, #tpu.memory_space<vmem>>, %arg8: memref<16x128xf32, #tpu.memory_space<vmem>>) attributes {dimension_semantics = [#tpu.dimension_semantics<parallel>], iteration_bounds = array<i64: 2>, scalar_prefetch = 0 : i64, scratch_operands = 0 : i64, tpu.core_type = #tpu.core_type<tc>, window_params = [{transform_indices = @transform_0, window_bounds = array<i64: 16, 128>}, {pipeline_mode = #tpu.pipeline_mode<synchronous>, transform_indices = @transform_1, window_bounds = array<i64: 128, 256>}, {pipeline_mode = #tpu.pipeline_mode<synchronous>, transform_indices = @transform_2, window_bounds = array<i64: 1, 256>}, {pipeline_mode = #tpu.pipeline_mode<synchronous>, transform_indices = @transform_3, window_bounds = array<i64: 256, 128>}, {pipeline_mode = #tpu.pipeline_mode<synchronous>, transform_indices = @transform_4, window_bounds = array<i64: 1, 128>}, {pipeline_mode = #tpu.pipeline_mode<synchronous>, transform_indices = @transform_5, window_bounds = array<i64: 128, 128>}, {pipeline_mode = #tpu.pipeline_mode<synchronous>, transform_indices = @transform_6, window_bounds = array<i64: 1, 128>}, {transform_indices = @transform_7, window_bounds = array<i64: 16, 128>}]} {
    %c0 = arith.constant 0 : index
    %c0_0 = arith.constant 0 : index
    %0 = vector.load %arg1[%c0, %c0_0] : memref<16x128xbf16, #tpu.memory_space<vmem>>, vector<16x128xbf16>
    %c0_1 = arith.constant 0 : index
    %c0_2 = arith.constant 0 : index
    %1 = vector.load %arg2[%c0_1, %c0_2] : memref<128x256xbf16, #tpu.memory_space<vmem>>, vector<128x256xbf16>
    %cst = arith.constant dense<0.000000e+00> : vector<16x256xf32>
    %2 = tpu.matmul %0, %1, %cst {dimension_numbers = #tpu.dot_dimension_numbers<[1], [0], [0], [1], [0, 0, 1, 1], [], []>} : vector<16x128xbf16>, vector<128x256xbf16>, vector<16x256xf32> -> vector<16x256xf32>
    %c0_3 = arith.constant 0 : index
    %c0_4 = arith.constant 0 : index
    %3 = vector.load %arg3[%c0_3, %c0_4] : memref<1x256xf32, #tpu.memory_space<vmem>>, vector<1x256xf32>
    %4 = vector.broadcast %3 : vector<1x256xf32> to vector<16x256xf32>
    %5 = arith.addf %2, %4 : vector<16x256xf32>
    %cst_5 = arith.constant 0.000000e+00 : f32
    %6 = vector.broadcast %cst_5 : f32 to vector<16x256xf32>
    %7 = arith.maximumf %5, %6 : vector<16x256xf32>
    %8 = arith.truncf %7 : vector<16x256xf32> to vector<16x256xbf16>
    %c0_6 = arith.constant 0 : index
    %c0_7 = arith.constant 0 : index
    %9 = vector.load %arg4[%c0_6, %c0_7] : memref<256x128xbf16, #tpu.memory_space<vmem>>, vector<256x128xbf16>
    %cst_8 = arith.constant dense<0.000000e+00> : vector<16x128xf32>
    %10 = tpu.matmul %8, %9, %cst_8 {dimension_numbers = #tpu.dot_dimension_numbers<[1], [0], [0], [1], [0, 0, 1, 1], [], []>} : vector<16x256xbf16>, vector<256x128xbf16>, vector<16x128xf32> -> vector<16x128xf32>
    %c0_9 = arith.constant 0 : index
    %c0_10 = arith.constant 0 : index
    %11 = vector.load %arg5[%c0_9, %c0_10] : memref<1x128xf32, #tpu.memory_space<vmem>>, vector<1x128xf32>
    %12 = vector.broadcast %11 : vector<1x128xf32> to vector<16x128xf32>
    %13 = arith.addf %10, %12 : vector<16x128xf32>
    %cst_11 = arith.constant 0.000000e+00 : f32
    %14 = vector.broadcast %cst_11 : f32 to vector<16x128xf32>
    %15 = arith.maximumf %13, %14 : vector<16x128xf32>
    %16 = arith.truncf %15 : vector<16x128xf32> to vector<16x128xbf16>
    %c0_12 = arith.constant 0 : index
    %c0_13 = arith.constant 0 : index
    %17 = vector.load %arg6[%c0_12, %c0_13] : memref<128x128xbf16, #tpu.memory_space<vmem>>, vector<128x128xbf16>
    %cst_14 = arith.constant dense<0.000000e+00> : vector<16x128xf32>
    %18 = tpu.matmul %16, %17, %cst_14 {dimension_numbers = #tpu.dot_dimension_numbers<[1], [0], [0], [1], [0, 0, 1, 1], [], []>} : vector<16x128xbf16>, vector<128x128xbf16>, vector<16x128xf32> -> vector<16x128xf32>
    %c0_15 = arith.constant 0 : index
    %c0_16 = arith.constant 0 : index
    %19 = vector.load %arg7[%c0_15, %c0_16] : memref<1x128xf32, #tpu.memory_space<vmem>>, vector<1x128xf32>
    %20 = vector.broadcast %19 : vector<1x128xf32> to vector<16x128xf32>
    %21 = arith.addf %18, %20 : vector<16x128xf32>
    %22 = math.tanh %21 : vector<16x128xf32>
    %c0_17 = arith.constant 0 : index
    %c0_18 = arith.constant 0 : index
    %23 = vector.load %arg8[%c0_17, %c0_18] : memref<16x128xf32, #tpu.memory_space<vmem>>, vector<16x128xf32>
    tpu.vector_store %arg8[%c0_17, %c0_18], %22 {strides = array<i32>} : memref<16x128xf32, #tpu.memory_space<vmem>>, vector<16x128xf32>,
    return
  }
  func.func @transform_0(%arg0: i32) -> (i32, i32) {
    %c0_i32 = arith.constant 0 : i32
    %c0_i32_0 = arith.constant 0 : i32
    return %arg0, %c0_i32 : i32, i32
  }
  func.func @transform_1(%arg0: i32) -> (i32, i32) {
    %c0_i32 = arith.constant 0 : i32
    %c0_i32_0 = arith.constant 0 : i32
    %c0_i32_1 = arith.constant 0 : i32
    return %c0_i32, %c0_i32_0 : i32, i32
  }
  func.func @transform_2(%arg0: i32) -> (i32, i32) {
    %c0_i32 = arith.constant 0 : i32
    %c0_i32_0 = arith.constant 0 : i32
    %c0_i32_1 = arith.constant 0 : i32
    return %c0_i32, %c0_i32_0 : i32, i32
  }
  func.func @transform_3(%arg0: i32) -> (i32, i32) {
    %c0_i32 = arith.constant 0 : i32
    %c0_i32_0 = arith.constant 0 : i32
    %c0_i32_1 = arith.constant 0 : i32
    return %c0_i32, %c0_i32_0 : i32, i32
  }
  func.func @transform_4(%arg0: i32) -> (i32, i32) {
    %c0_i32 = arith.constant 0 : i32
    %c0_i32_0 = arith.constant 0 : i32
    %c0_i32_1 = arith.constant 0 : i32
    return %c0_i32, %c0_i32_0 : i32, i32
  }
  func.func @transform_5(%arg0: i32) -> (i32, i32) {
    %c0_i32 = arith.constant 0 : i32
    %c0_i32_0 = arith.constant 0 : i32
    %c0_i32_1 = arith.constant 0 : i32
    return %c0_i32, %c0_i32_0 : i32, i32
  }
  func.func @transform_6(%arg0: i32) -> (i32, i32) {
    %c0_i32 = arith.constant 0 : i32
    %c0_i32_0 = arith.constant 0 : i32
    %c0_i32_1 = arith.constant 0 : i32
    return %c0_i32, %c0_i32_0 : i32, i32
  }
  func.func @transform_7(%arg0: i32) -> (i32, i32) {
    %c0_i32 = arith.constant 0 : i32
    %c0_i32_0 = arith.constant 0 : i32
    return %arg0, %c0_i32 : i32, i32
  }
}

</mosaic_0001>

<llo_original>
// kernel: tpu_custom_call.1
$region0: #{tpu_custom_call.1}
  #allocation0 [shape = 'u32[]', space=smem, size = 0x4, offset = 0x4, fixed_abs, tag = 'smem constant byte address 0x4 - core index']
  #allocation1 [shape = 'u32[144,128]{1,0:T(1,128)}', space=vmem, size = 0x12000, scoped, tag = 'internal scratch']
  %s0 = inlined_call_operand.hbm [shape: bf16[32,128], index: 0, kind: input, shape index: {}]
  %s1 = inlined_call_operand.hbm [shape: bf16[128,256], index: 1, kind: input, shape index: {}]
  %s2 = inlined_call_operand.vmem [shape: f32[1,256], index: 2, kind: input, shape index: {}]
  %s3 = inlined_call_operand.hbm [shape: bf16[256,128], index: 3, kind: input, shape index: {}]
  %s4 = inlined_call_operand.vmem [shape: f32[1,128], index: 4, kind: input, shape index: {}]
  %s5 = inlined_call_operand.hbm [shape: bf16[128,128], index: 5, kind: input, shape index: {}]
  %s6 = inlined_call_operand.vmem [shape: f32[1,128], index: 6, kind: input, shape index: {}]
  %s7 = inlined_call_operand.hbm [shape: f32[32,128], index: 7, kind: output, shape index: {}]
  %s8 = sld [smem:[#allocation0]]
  $region77: #{tpu_custom_call.1} parent=0
    _
  %s10 = ssub.s32 1, %s8
  %s11 = scalar_select 0, %s10, %s8
  $region1: #{tpu_custom_call.1} parent=0
    #allocation2 [shape = 'u8[8192]{0}', space=vmem, size = 0x2000, scoped, tag = 'input window, operand 0']
    #allocation3 [shape = 's32[2]{0}', space=sflag, size = 0x8, scoped, tag = 'scoped memory for tpu_custom_call.1']
    #allocation4 [shape = 's32[2]{0}', space=sflag, size = 0x8, scoped, tag = 'scoped memory for tpu_custom_call.1']
    #allocation5 [shape = 'u8[65536]{0}', space=vmem, size = 0x10000, scoped, tag = 'input window, operand 1, single buffered']
    #allocation6 [shape = 's32[1]{0}', space=sflag, size = 0x4, scoped, tag = 'scoped memory for tpu_custom_call.1']
    #allocation7 [shape = 'u8[65536]{0}', space=vmem, size = 0x10000, scoped, tag = 'input window, operand 3, single buffered']
    #allocation8 [shape = 'u8[32768]{0}', space=vmem, size = 0x8000, scoped, tag = 'input window, operand 5, single buffered']
    #allocation9 [shape = 's32[1]{0}', space=sflag, size = 0x4, scoped, tag = 'scoped memory for tpu_custom_call.1']
    #allocation10 [shape = 'u8[16384]{0}', space=vmem, size = 0x4000, scoped, tag = 'output window, operand 0']
    %12 = vsyncpa [#allocation3], 0
    %s13 = scalar_lea.sflag [#allocation3], 1
    %14 = vsyncpa %s13, 0
    %15 = vsyncpa [#allocation6], 0
    %16 = vsyncpa [#allocation9], 0
    %17 = vsyncpa [#allocation4], 0
    %s18 = scalar_lea.sflag [#allocation4], 1
    %19 = vsyncpa %s18, 0
    loop: start=0, step=1, limit=4
    $region2: #{tpu_custom_call.1} parent=1 // loop_pre_header
      _
    $region3: #{tpu_custom_call.1} parent=1 // loop_header
      %s21 = sphi 0, %s25
      %p22 = scmp.ge.s32.totalorder %s21, 4
      %s31 = sphi 0, %s33
      %s34 = sphi 0, %s31
      %s35 = sphi 0, %s34
      %s51 = sphi 0, %s35
      %s55 = sphi 0, %s55
      %s57 = sphi 0, %s55
      %s58 = sphi 0, %s57
      %s72 = sphi 0, %s58
      %s76 = sphi 0, %s76
      %s78 = sphi 0, %s76
      %s79 = sphi 0, %s78
      %s93 = sphi 0, %s79
      %s97 = sphi 0, %s97
      %s99 = sphi 0, %s97
      %s100 = sphi 0, %s99
      %s114 = sphi 0, %s100
      %s118 = sphi 0, %s118
      %s120 = sphi 0, %s118
      %s121 = sphi 0, %s120
      %s135 = sphi 0, %s121
      %s139 = sphi 0, %s139
      %s141 = sphi 0, %s139
      %s142 = sphi 0, %s141
      %s156 = sphi 0, %s142
      %s160 = sphi 0, %s160
      %s162 = sphi 0, %s160
      %s163 = sphi 0, %s162
      %s177 = sphi 0, %s163
      %s183 = sphi 0, %s185
      %s186 = sphi 0, %s183
      %s187 = sphi 0, %s186
      %s203 = sphi 0, %s187
    $region4: #{tpu_custom_call.1} parent=1 // loop_header_branch
      %24 = sbr.rel (%p22) target = $region8
    $region5: #{tpu_custom_call.1} parent=1 // loop_body
      %s26 = ssub.s32 %s21, 1
      %s27 = ssub.s32 %s21, 2
      %s28 = sadd.s32 %s21, 1
      %s29 = ssub.s32 %s21, %s28
      %p30 = scmp.eq.s32.totalorder %s29, 0
      %s32 = sadd.s32 %s31, 1
      %s33 = scalar_select %p30, %s31, %s32
      %p36 = pneg %p30
      %p37 = scmp.eq.s32.totalorder %s21, 1
      %p38 = por %p36, %p37
      %p39 = scmp.ne.s32.totalorder %s31, %s34
      %p40 = scmp.eq.s32.totalorder %s21, 0
      %p41 = por %p39, %p40
      %p42 = scmp.ne.s32.totalorder %s31, %s34
      %p43 = scmp.eq.s32.totalorder %s26, 1
      %p44 = por %p42, %p43
      %p45 = scmp.ne.s32.totalorder %s34, %s35
      %p46 = scmp.eq.s32.totalorder %s26, 0
      %p47 = por %p45, %p46
      %p48 = scmp.ne.s32.totalorder %s34, %s35
      %p49 = scmp.eq.s32.totalorder %s27, 1
      %p50 = por %p48, %p49
      %p52 = scmp.ne.s32.totalorder %s35, %s51
      %p53 = scmp.eq.s32.totalorder %s27, 0
      %p54 = por %p52, %p53
      %s56 = sadd.s32 %s55, 1
      %p59 = scmp.eq.s32.totalorder %s21, 1
      %p60 = scmp.ne.s32.totalorder %s55, %s57
      %p61 = scmp.eq.s32.totalorder %s21, 0
      %p62 = por %p60, %p61
      %p63 = scmp.ne.s32.totalorder %s55, %s57
      %p64 = scmp.eq.s32.totalorder %s26, 1
      %p65 = por %p63, %p64
      %p66 = scmp.ne.s32.totalorder %s57, %s58
      %p67 = scmp.eq.s32.totalorder %s26, 0
      %p68 = por %p66, %p67
      %p69 = scmp.ne.s32.totalorder %s57, %s58
      %p70 = scmp.eq.s32.totalorder %s27, 1
      %p71 = por %p69, %p70
      %p73 = scmp.ne.s32.totalorder %s58, %s72
      %p74 = scmp.eq.s32.totalorder %s27, 0
      %p75 = por %p73, %p74
      %s77 = sadd.s32 %s76, 1
      %p80 = scmp.eq.s32.totalorder %s21, 1
      %p81 = scmp.ne.s32.totalorder %s76, %s78
      %p82 = scmp.eq.s32.totalorder %s21, 0
      %p83 = por %p81, %p82
      %p84 = scmp.ne.s32.totalorder %s76, %s78
      %p85 = scmp.eq.s32.totalorder %s26, 1
      %p86 = por %p84, %p85
      %p87 = scmp.ne.s32.totalorder %s78, %s79
      %p88 = scmp.eq.s32.totalorder %s26, 0
      %p89 = por %p87, %p88
      %p90 = scmp.ne.s32.totalorder %s78, %s79
      %p91 = scmp.eq.s32.totalorder %s27, 1
      %p92 = por %p90, %p91
      %p94 = scmp.ne.s32.totalorder %s79, %s93
      %p95 = scmp.eq.s32.totalorder %s27, 0
      %p96 = por %p94, %p95
      %s98 = sadd.s32 %s97, 1
      %p101 = scmp.eq.s32.totalorder %s21, 1
      %p102 = scmp.ne.s32.totalorder %s97, %s99
      %p103 = scmp.eq.s32.totalorder %s21, 0
      %p104 = por %p102, %p103
      %p105 = scmp.ne.s32.totalorder %s97, %s99
      %p106 = scmp.eq.s32.totalorder %s26, 1
      %p107 = por %p105, %p106
      %p108 = scmp.ne.s32.totalorder %s99, %s100
      %p109 = scmp.eq.s32.totalorder %s26, 0
      %p110 = por %p108, %p109
      %p111 = scmp.ne.s32.totalorder %s99, %s100
      %p112 = scmp.eq.s32.totalorder %s27, 1
      %p113 = por %p111, %p112
      %p115 = scmp.ne.s32.totalorder %s100, %s114
      %p116 = scmp.eq.s32.totalorder %s27, 0
      %p117 = por %p115, %p116
      %s119 = sadd.s32 %s118, 1
      %p122 = scmp.eq.s32.totalorder %s21, 1
      %p123 = scmp.ne.s32.totalorder %s118, %s120
      %p124 = scmp.eq.s32.totalorder %s21, 0
      %p125 = por %p123, %p124
      %p126 = scmp.ne.s32.totalorder %s118, %s120
      %p127 = scmp.eq.s32.totalorder %s26, 1
      %p128 = por %p126, %p127
      %p129 = scmp.ne.s32.totalorder %s120, %s121
      %p130 = scmp.eq.s32.totalorder %s26, 0
      %p131 = por %p129, %p130
      %p132 = scmp.ne.s32.totalorder %s120, %s121
      %p133 = scmp.eq.s32.totalorder %s27, 1
      %p134 = por %p132, %p133
      %p136 = scmp.ne.s32.totalorder %s121, %s135
      %p137 = scmp.eq.s32.totalorder %s27, 0
      %p138 = por %p136, %p137
      %s140 = sadd.s32 %s139, 1
      %p143 = scmp.eq.s32.totalorder %s21, 1
      %p144 = scmp.ne.s32.totalorder %s139, %s141
      %p145 = scmp.eq.s32.totalorder %s21, 0
      %p146 = por %p144, %p145
      %p147 = scmp.ne.s32.totalorder %s139, %s141
      %p148 = scmp.eq.s32.totalorder %s26, 1
      %p149 = por %p147, %p148
      %p150 = scmp.ne.s32.totalorder %s141, %s142
      %p151 = scmp.eq.s32.totalorder %s26, 0
      %p152 = por %p150, %p151
      %p153 = scmp.ne.s32.totalorder %s141, %s142
      %p154 = scmp.eq.s32.totalorder %s27, 1
      %p155 = por %p153, %p154
      %p157 = scmp.ne.s32.totalorder %s142, %s156
      %p158 = scmp.eq.s32.totalorder %s27, 0
      %p159 = por %p157, %p158
      %s161 = sadd.s32 %s160, 1
      %p164 = scmp.eq.s32.totalorder %s21, 1
      %p165 = scmp.ne.s32.totalorder %s160, %s162
      %p166 = scmp.eq.s32.totalorder %s21, 0
      %p167 = por %p165, %p166
      %p168 = scmp.ne.s32.totalorder %s160, %s162
      %p169 = scmp.eq.s32.totalorder %s26, 1
      %p170 = por %p168, %p169
      %p171 = scmp.ne.s32.totalorder %s162, %s163
      %p172 = scmp.eq.s32.totalorder %s26, 0
      %p173 = por %p171, %p172
      %p174 = scmp.ne.s32.totalorder %s162, %s163
      %p175 = scmp.eq.s32.totalorder %s27, 1
      %p176 = por %p174, %p175
      %p178 = scmp.ne.s32.totalorder %s163, %s177
      %p179 = scmp.eq.s32.totalorder %s27, 0
      %p180 = por %p178, %p179
      %s181 = ssub.s32 %s21, %s28
      %p182 = scmp.eq.s32.totalorder %s181, 0
      %s184 = sadd.s32 %s183, 1
      %s185 = scalar_select %p182, %s183, %s184
      %p188 = pneg %p182
      %p189 = scmp.eq.s32.totalorder %s21, 1
      %p190 = por %p188, %p189
      %p191 = scmp.ne.s32.totalorder %s183, %s186
      %p192 = scmp.eq.s32.totalorder %s21, 0
      %p193 = por %p191, %p192
      %p194 = scmp.ne.s32.totalorder %s183, %s186
      %p195 = scmp.eq.s32.totalorder %s26, 1
      %p196 = por %p194, %p195
      %p197 = scmp.ne.s32.totalorder %s186, %s187
      %p198 = scmp.eq.s32.totalorder %s26, 0
      %p199 = por %p197, %p198
      %p200 = scmp.ne.s32.totalorder %s186, %s187
      %p201 = scmp.eq.s32.totalorder %s27, 1
      %p202 = por %p200, %p201
      %p204 = scmp.ne.s32.totalorder %s187, %s203
      %p205 = scmp.eq.s32.totalorder %s27, 0
      %p206 = por %p204, %p205
      %p207 = scmp.le.s32.totalorder 1, %s21
      %p208 = scmp.lt.s32.totalorder %s21, 3
      %p209 = pnand %p207, %p208
      %p210 = pneg %p209
      // Predicated region
      $region9: #{tpu_custom_call.1} parent=5 // pred_check
        _
      $region10: #{tpu_custom_call.1} parent=5 // pred_check_branch
        %212 = sbr.rel (%p209) target = $region12
      $region11: #{tpu_custom_call.1} parent=5 // pred_region
        %s213 = ssub.s32 %s21, 1
        // Predicated region
        $region13: #{tpu_custom_call.1} parent=11 // pred_check
          %p214 = pneg %p68
        $region14: #{tpu_custom_call.1} parent=11 // pred_check_branch
          %216 = sbr.rel (%p214) target = $region16
        $region15: #{tpu_custom_call.1} parent=11 // pred_region
          %s218 = ssub.s32 2048, 2048
          %219 = vsyncadd [#allocation6], %s218
          %s220 = sshll.u32 [#allocation5], 4
          %s221 = int_to_ptr.vmem [resolvable:$true] %s220
          %226 = dma.hbm_to_vmem [thread:$0]  %s1, 2048, %s221, [#allocation6], 128, 128, 8
        $region16: #{tpu_custom_call.1} parent=11 // pred_fallthru
          _
        // Predicated region
        $region17: #{tpu_custom_call.1} parent=11 // pred_check
          %p227 = pneg %p89
        $region18: #{tpu_custom_call.1} parent=11 // pred_check_branch
          %229 = sbr.rel (%p227) target = $region20
        $region19: #{tpu_custom_call.1} parent=11 // pred_region
          _
        $region20: #{tpu_custom_call.1} parent=11 // pred_fallthru
          _
        // Predicated region
        $region21: #{tpu_custom_call.1} parent=11 // pred_check
          %p230 = pneg %p110
        $region22: #{tpu_custom_call.1} parent=11 // pred_check_branch
          %232 = sbr.rel (%p230) target = $region24
        $region23: #{tpu_custom_call.1} parent=11 // pred_region
          %s234 = ssub.s32 2048, 2048
          %235 = vsyncadd [#allocation6], %s234
          %s236 = sshll.u32 [#allocation7], 4
          %s237 = int_to_ptr.vmem [resolvable:$true] %s236
          %242 = dma.hbm_to_vmem [thread:$0]  %s3, 2048, %s237, [#allocation6], 64, 64, 4
        $region24: #{tpu_custom_call.1} parent=11 // pred_fallthru
          _
        // Predicated region
        $region25: #{tpu_custom_call.1} parent=11 // pred_check
          %p243 = pneg %p131
        $region26: #{tpu_custom_call.1} parent=11 // pred_check_branch
          %245 = sbr.rel (%p243) target = $region28
        $region27: #{tpu_custom_call.1} parent=11 // pred_region
          _
        $region28: #{tpu_custom_call.1} parent=11 // pred_fallthru
          _
        // Predicated region
        $region29: #{tpu_custom_call.1} parent=11 // pred_check
          %p246 = pneg %p152
        $region30: #{tpu_custom_call.1} parent=11 // pred_check_branch
          %248 = sbr.rel (%p246) target = $region32
        $region31: #{tpu_custom_call.1} parent=11 // pred_region
          %s250 = ssub.s32 1024, 1024
          %251 = vsyncadd [#allocation9], %s250
          %s252 = sshll.u32 [#allocation8], 4
          %s253 = int_to_ptr.vmem [resolvable:$true] %s252
          %258 = dma.hbm_to_vmem [thread:$0]  %s5, 1024, %s253, [#allocation9], 64, 64, 4
        $region32: #{tpu_custom_call.1} parent=11 // pred_fallthru
          _
        // Predicated region
        $region33: #{tpu_custom_call.1} parent=11 // pred_check
          %p259 = pneg %p173
        $region34: #{tpu_custom_call.1} parent=11 // pred_check_branch
          %261 = sbr.rel (%p259) target = $region36
        $region35: #{tpu_custom_call.1} parent=11 // pred_region
          _
        $region36: #{tpu_custom_call.1} parent=11 // pred_fallthru
          _
      $region12: #{tpu_custom_call.1} parent=5 // pred_fallthru
        _
      %p262 = scmp.lt.s32.totalorder %s21, 2
      // Predicated region
      $region37: #{tpu_custom_call.1} parent=5 // pred_check
        %p263 = pneg %p262
      $region38: #{tpu_custom_call.1} parent=5 // pred_check_branch
        %265 = sbr.rel (%p263) target = $region40
      $region39: #{tpu_custom_call.1} parent=5 // pred_region
        // Predicated region
        $region41: #{tpu_custom_call.1} parent=39 // pred_check
          %p266 = pneg %p41
        $region42: #{tpu_custom_call.1} parent=39 // pred_check_branch
          %268 = sbr.rel (%p266) target = $region44
        $region43: #{tpu_custom_call.1} parent=39 // pred_region
          %s269 = sand.u32 %s31, 1
          %s270 = scalar_lea.sflag [#allocation3], %s269
          %s271 = sand.u32 %s31, 1
          %s272 = smul.addr %s271, 8
          %s273 = scalar_lea.vmem [#allocation2], %s272
          %s274 = smul.u32 2, %s21
          %s276 = ssub.s32 128, 128
          %277 = vsyncadd %s270, %s276
          %s278 = smul.addr %s274, 64
          %s279 = scalar_lea.hbm %s0, %s278
          %s280 = sshll.u32 %s273, 4
          %s281 = int_to_ptr.vmem [resolvable:$true] %s280
          %286 = dma.hbm_to_vmem [thread:$0]  %s279, 128, %s281, %s270, 64, 64, 4
        $region44: #{tpu_custom_call.1} parent=39 // pred_fallthru
          _
      $region40: #{tpu_custom_call.1} parent=5 // pred_fallthru
        _
      %p287 = scmp.le.s32.totalorder 1, %s21
      %p288 = scmp.lt.s32.totalorder %s21, 3
      %p289 = pnand %p287, %p288
      %p290 = pneg %p289
      // Predicated region
      $region45: #{tpu_custom_call.1} parent=5 // pred_check
        _
      $region46: #{tpu_custom_call.1} parent=5 // pred_check_branch
        %292 = sbr.rel (%p289) target = $region48
      $region47: #{tpu_custom_call.1} parent=5 // pred_region
        %s293 = ssub.s32 %s21, 1
        %s294 = sand.u32 %s34, 1
        %s295 = scalar_lea.sflag [#allocation3], %s294
        %s296 = sand.u32 %s34, 1
        %s297 = smul.addr %s296, 8
        %s298 = scalar_lea.vmem [#allocation2], %s297
        // Predicated region
        $region49: #{tpu_custom_call.1} parent=47 // pred_check
          %p299 = pneg %p47
        $region50: #{tpu_custom_call.1} parent=47 // pred_check_branch
          %301 = sbr.rel (%p299) target = $region52
        $region51: #{tpu_custom_call.1} parent=47 // pred_region
          %302 = dma.done %s295, 128
        $region52: #{tpu_custom_call.1} parent=47 // pred_fallthru
          _
        // Predicated region
        $region53: #{tpu_custom_call.1} parent=47 // pred_check
          %p303 = pneg %p68
        $region54: #{tpu_custom_call.1} parent=47 // pred_check_branch
          %305 = sbr.rel (%p303) target = $region56
        $region55: #{tpu_custom_call.1} parent=47 // pred_region
          %306 = dma.done [#allocation6], 2048
        $region56: #{tpu_custom_call.1} parent=47 // pred_fallthru
          _
        // Predicated region
        $region57: #{tpu_custom_call.1} parent=47 // pred_check
          %p307 = pneg %p110
        $region58: #{tpu_custom_call.1} parent=47 // pred_check_branch
          %309 = sbr.rel (%p307) target = $region60
        $region59: #{tpu_custom_call.1} parent=47 // pred_region
          %310 = dma.done [#allocation6], 2048
        $region60: #{tpu_custom_call.1} parent=47 // pred_fallthru
          _
        // Predicated region
        $region61: #{tpu_custom_call.1} parent=47 // pred_check
          %p311 = pneg %p152
        $region62: #{tpu_custom_call.1} parent=47 // pred_check_branch
          %313 = sbr.rel (%p311) target = $region64
        $region63: #{tpu_custom_call.1} parent=47 // pred_region
          %314 = dma.done [#allocation9], 1024
        $region64: #{tpu_custom_call.1} parent=47 // pred_fallthru
          _
        %s315 = sand.u32 %s34, 1
        %s316 = scalar_lea.sflag [#allocation3], %s315
        %s317 = sand.u32 %s34, 1
        %s318 = smul.addr %s317, 8
        %s319 = scalar_lea.vmem [#allocation2], %s318
        %p320 = pneg %p47
        %p321 = pneg %p44
        %p322 = pneg %p68
        %p323 = pneg %p65
        %p324 = pneg %p89
        %p325 = pneg %p86
        %p326 = pneg %p110
        %p327 = pneg %p107
        %p328 = pneg %p131
        %p329 = pneg %p128
        %p330 = pneg %p152
        %p331 = pneg %p149
        %p332 = pneg %p173
        %p333 = pneg %p170
        %p334 = pneg %p199
        %p335 = pneg %p196
        %s336 = sand.u32 %s186, 1
        %s337 = scalar_lea.sflag [#allocation4], %s336
        %s338 = sand.u32 %s186, 1
        %s339 = smul.addr %s338, 16
        %s340 = scalar_lea.vmem [#allocation10], %s339
        %s341 = smul.u32 2, %s26
        %s342 = smul.u32 2, %s26
        %v344 = vld [vmem:[%s298] sm:$0xf]
        %v345 = vld [vmem:[%s298 + $0x4] sm:$0xf]
        %v346 = vld [vmem:[#allocation5] sm:$0xff]
        %v347 = vld [vmem:[#allocation5 + $0x8] sm:$0xff]
        %v348 = vld [vmem:[#allocation5 + $0x10] sm:$0xff]
        %v349 = vld [vmem:[#allocation5 + $0x18] sm:$0xff]
        %v350 = vld [vmem:[#allocation5 + $0x20] sm:$0xff]
        %v351 = vld [vmem:[#allocation5 + $0x28] sm:$0xff]
        %v352 = vld [vmem:[#allocation5 + $0x30] sm:$0xff]
        %v353 = vld [vmem:[#allocation5 + $0x38] sm:$0xff]
        %v354 = vld [vmem:[#allocation5 + $0x40] sm:$0xff]
        %v355 = vld [vmem:[#allocation5 + $0x48] sm:$0xff]
        %v356 = vld [vmem:[#allocation5 + $0x50] sm:$0xff]
        %v357 = vld [vmem:[#allocation5 + $0x58] sm:$0xff]
        %v358 = vld [vmem:[#allocation5 + $0x60] sm:$0xff]
        %v359 = vld [vmem:[#allocation5 + $0x68] sm:$0xff]
        %v360 = vld [vmem:[#allocation5 + $0x70] sm:$0xff]
        %v361 = vld [vmem:[#allocation5 + $0x78] sm:$0xff]
        %v362 = vld [vmem:[%s2] sm:$0x3]
        %v364 = vlaneseq
        %v365 = vshrl.u32 %v364, 7
        %v366 = vsub.s32 0, %v365
        %v367 = vrot.slane %v362, %v366
        %v368 = vlaneseq
        %v369 = vshrl.u32 %v368, 7
        %v370 = vsub.s32 1, %v369
        %v371 = vrot.slane %v362, %v370
        %v376 = vunpack.c.l.b16 %v344
        %v377 = vunpack.c.l.b16 %v345
        %v378 = vpack.c.b16 %v377, %v376
        %v396 = vunpack.c.l.b16 %v346
        %v397 = vunpack.c.h.b16 %v346
        %v398 = vunpack.c.l.b16 %v347
        %v399 = vunpack.c.h.b16 %v347
        %v400 = vunpack.c.l.b16 %v348
        %v401 = vunpack.c.h.b16 %v348
        %v402 = vunpack.c.l.b16 %v349
        %v403 = vunpack.c.h.b16 %v349
        %v404 = vunpack.c.l.b16 %v350
        %v405 = vunpack.c.h.b16 %v350
        %v406 = vunpack.c.l.b16 %v351
        %v407 = vunpack.c.h.b16 %v351
        %v408 = vunpack.c.l.b16 %v352
        %v409 = vunpack.c.h.b16 %v352
        %v410 = vunpack.c.l.b16 %v353
        %v411 = vunpack.c.h.b16 %v353
        %v412 = vunpack.c.l.b16 %v354
        %v413 = vunpack.c.h.b16 %v354
        %v414 = vunpack.c.l.b16 %v355
        %v415 = vunpack.c.h.b16 %v355
        %v416 = vunpack.c.l.b16 %v356
        %v417 = vunpack.c.h.b16 %v356
        %v418 = vunpack.c.l.b16 %v357
        %v419 = vunpack.c.h.b16 %v357
        %v420 = vunpack.c.l.b16 %v358
        %v421 = vunpack.c.h.b16 %v358
        %v422 = vunpack.c.l.b16 %v359
        %v423 = vunpack.c.h.b16 %v359
        %v424 = vunpack.c.l.b16 %v360
        %v425 = vunpack.c.h.b16 %v360
        %v426 = vunpack.c.l.b16 %v361
        %v427 = vunpack.c.h.b16 %v361
        %v428 = vpack.c.b16 %v398, %v396
        %v429 = vpack.c.b16 %v399, %v397
        %v430 = vpack.c.b16 %v402, %v400
        %v431 = vpack.c.b16 %v403, %v401
        %v432 = vpack.c.b16 %v406, %v404
        %v433 = vpack.c.b16 %v407, %v405
        %v434 = vpack.c.b16 %v410, %v408
        %v435 = vpack.c.b16 %v411, %v409
        %v436 = vpack.c.b16 %v414, %v412
        %v437 = vpack.c.b16 %v415, %v413
        %v438 = vpack.c.b16 %v418, %v416
        %v439 = vpack.c.b16 %v419, %v417
        %v440 = vpack.c.b16 %v422, %v420
        %v441 = vpack.c.b16 %v423, %v421
        %v442 = vpack.c.b16 %v426, %v424
        %v443 = vpack.c.b16 %v427, %v425
        %460 = vmatprep.subr.bf16.mxu0 %v429
        %461 = vmatpush1.bf16.msra.mxu0 %v428
        %462 = vmatprep.subr.bf16.mxu0 %v431
        %463 = vmatpush1.bf16.msra.mxu0 %v430
        %464 = vmatprep.subr.bf16.mxu0 %v433
        %465 = vmatpush1.bf16.msra.mxu0 %v432
        %466 = vmatprep.subr.bf16.mxu0 %v435
        %467 = vmatpush1.bf16.msra.mxu0 %v434
        %468 = vmatprep.subr.bf16.mxu0 %v437
        %469 = vmatpush1.bf16.msra.mxu0 %v436
        %470 = vmatprep.subr.bf16.mxu0 %v439
        %471 = vmatpush1.bf16.msra.mxu0 %v438
        %472 = vmatprep.subr.bf16.mxu0 %v441
        %473 = vmatpush1.bf16.msra.mxu0 %v440
        %474 = vmatprep.subr.bf16.mxu0 %v443
        %475 = vmatpush1.bf16.msra.mxu0 %v442
        %476 = vmatprep.subr.bf16.mxu0 0
        %477 = vmatpush1.bf16.msra.mxu0 0
        %478 = vmatprep.subr.bf16.mxu0 0
        %479 = vmatpush1.bf16.msra.mxu0 0
        %480 = vmatprep.subr.bf16.mxu0 0
        %481 = vmatpush1.bf16.msra.mxu0 0
        %482 = vmatprep.subr.bf16.mxu0 0
        %483 = vmatpush1.bf16.msra.mxu0 0
        %484 = vmatprep.subr.bf16.mxu0 0
        %485 = vmatpush1.bf16.msra.mxu0 0
        %486 = vmatprep.subr.bf16.mxu0 0
        %487 = vmatpush1.bf16.msra.mxu0 0
        %488 = vmatprep.subr.bf16.mxu0 0
        %489 = vmatpush1.bf16.msra.mxu0 0
        %490 = vmatprep.subr.bf16.mxu0 0
        %491 = vmatpush1.bf16.msra.mxu0 0
        %492 = vmatprep.mubr.bf16.mxu0 0
        %493 = vmatmul.mubr.bf16.gmra.mrb[0].mxu0 %v378
        %v494 = vpop.f32.mrb[0].mxu0
        %v495 = vadd.f32 %v367, %v494
        %v496 = vpop.f32.mrb[0].mxu0
        %v497 = vadd.f32 %v371, %v496
        %v498 = vpop.f32.mrb[0].mxu0
        %v499 = vadd.f32 %v367, %v498
        %v500 = vpop.f32.mrb[0].mxu0
        %v501 = vadd.f32 %v371, %v500
        %502 = vdwg.mxu0
        %v503 = vmax.f32 %v495, 0.0
        %v504 = vmax.f32 %v497, 0.0
        %v505 = vmax.f32 %v499, 0.0
        %v506 = vmax.f32 %v501, 0.0
        %v507 = vpack.c.bf16 %v505, %v503
        %v508 = vpack.c.bf16 %v506, %v504
        %v509 = vld [vmem:[#allocation7] sm:$0xf]
        %v510 = vld [vmem:[#allocation7 + $0x4] sm:$0xf]
        %v511 = vld [vmem:[#allocation7 + $0x8] sm:$0xf]
        %v512 = vld [vmem:[#allocation7 + $0xc] sm:$0xf]
        %v513 = vld [vmem:[#allocation7 + $0x10] sm:$0xf]
        %v514 = vld [vmem:[#allocation7 + $0x14] sm:$0xf]
        %v515 = vld [vmem:[#allocation7 + $0x18] sm:$0xf]
        %v516 = vld [vmem:[#allocation7 + $0x1c] sm:$0xf]
        %v517 = vld [vmem:[#allocation7 + $0x20] sm:$0xf]
        %v518 = vld [vmem:[#allocation7 + $0x24] sm:$0xf]
        %v519 = vld [vmem:[#allocation7 + $0x28] sm:$0xf]
        %v520 = vld [vmem:[#allocation7 + $0x2c] sm:$0xf]
        %v521 = vld [vmem:[#allocation7 + $0x30] sm:$0xf]
        %v522 = vld [vmem:[#allocation7 + $0x34] sm:$0xf]
        %v523 = vld [vmem:[#allocation7 + $0x38] sm:$0xf]
        %v524 = vld [vmem:[#allocation7 + $0x3c] sm:$0xf]
        %v525 = vld [vmem:[#allocation7 + $0x40] sm:$0xf]
        %v526 = vld [vmem:[#allocation7 + $0x44] sm:$0xf]
        %v527 = vld [vmem:[#allocation7 + $0x48] sm:$0xf]
        %v528 = vld [vmem:[#allocation7 + $0x4c] sm:$0xf]
        %v529 = vld [vmem:[#allocation7 + $0x50] sm:$0xf]
        %v530 = vld [vmem:[#allocation7 + $0x54] sm:$0xf]
        %v531 = vld [vmem:[#allocation7 + $0x58] sm:$0xf]
        %v532 = vld [vmem:[#allocation7 + $0x5c] sm:$0xf]
        %v533 = vld [vmem:[#allocation7 + $0x60] sm:$0xf]
        %v534 = vld [vmem:[#allocation7 + $0x64] sm:$0xf]
        %v535 = vld [vmem:[#allocation7 + $0x68] sm:$0xf]
        %v536 = vld [vmem:[#allocation7 + $0x6c] sm:$0xf]
        %v537 = vld [vmem:[#allocation7 + $0x70] sm:$0xf]
        %v538 = vld [vmem:[#allocation7 + $0x74] sm:$0xf]
        %v539 = vld [vmem:[#allocation7 + $0x78] sm:$0xf]
        %v540 = vld [vmem:[#allocation7 + $0x7c] sm:$0xf]
        %v541 = vld [vmem:[%s4] sm:$0x1]
        %v543 = vlaneseq
        %v544 = vshrl.u32 %v543, 7
        %v545 = vsub.s32 0, %v544
        %v546 = vrot.slane %v541, %v545
        %v580 = vunpack.c.l.b16 %v509
        %v581 = vunpack.c.l.b16 %v510
        %v582 = vunpack.c.l.b16 %v511
        %v583 = vunpack.c.l.b16 %v512
        %v584 = vunpack.c.l.b16 %v513
        %v585 = vunpack.c.l.b16 %v514
        %v586 = vunpack.c.l.b16 %v515
        %v587 = vunpack.c.l.b16 %v516
        %v588 = vunpack.c.l.b16 %v517
        %v589 = vunpack.c.l.b16 %v518
        %v590 = vunpack.c.l.b16 %v519
        %v591 = vunpack.c.l.b16 %v520
        %v592 = vunpack.c.l.b16 %v521
        %v593 = vunpack.c.l.b16 %v522
        %v594 = vunpack.c.l.b16 %v523
        %v595 = vunpack.c.l.b16 %v524
        %v596 = vunpack.c.l.b16 %v525
        %v597 = vunpack.c.l.b16 %v526
        %v598 = vunpack.c.l.b16 %v527
        %v599 = vunpack.c.l.b16 %v528
        %v600 = vunpack.c.l.b16 %v529
        %v601 = vunpack.c.l.b16 %v530
        %v602 = vunpack.c.l.b16 %v531
        %v603 = vunpack.c.l.b16 %v532
        %v604 = vunpack.c.l.b16 %v533
        %v605 = vunpack.c.l.b16 %v534
        %v606 = vunpack.c.l.b16 %v535
        %v607 = vunpack.c.l.b16 %v536
        %v608 = vunpack.c.l.b16 %v537
        %v609 = vunpack.c.l.b16 %v538
        %v610 = vunpack.c.l.b16 %v539
        %v611 = vunpack.c.l.b16 %v540
        %v612 = vpack.c.b16 %v581, %v580
        %v613 = vpack.c.b16 %v583, %v582
        %v614 = vpack.c.b16 %v585, %v584
        %v615 = vpack.c.b16 %v587, %v586
        %v616 = vpack.c.b16 %v589, %v588
        %v617 = vpack.c.b16 %v591, %v590
        %v618 = vpack.c.b16 %v593, %v592
        %v619 = vpack.c.b16 %v595, %v594
        %v620 = vpack.c.b16 %v597, %v596
        %v621 = vpack.c.b16 %v599, %v598
        %v622 = vpack.c.b16 %v601, %v600
        %v623 = vpack.c.b16 %v603, %v602
        %v624 = vpack.c.b16 %v605, %v604
        %v625 = vpack.c.b16 %v607, %v606
        %v626 = vpack.c.b16 %v609, %v608
        %v627 = vpack.c.b16 %v611, %v610
        %644 = vmatprep.subr.bf16.mxu0 0
        %645 = vmatpush1.bf16.msra.mxu0 %v612
        %646 = vmatprep.subr.bf16.mxu0 0
        %647 = vmatpush1.bf16.msra.mxu0 %v613
        %648 = vmatprep.subr.bf16.mxu0 0
        %649 = vmatpush1.bf16.msra.mxu0 %v614
        %650 = vmatprep.subr.bf16.mxu0 0
        %651 = vmatpush1.bf16.msra.mxu0 %v615
        %652 = vmatprep.subr.bf16.mxu0 0
        %653 = vmatpush1.bf16.msra.mxu0 %v616
        %654 = vmatprep.subr.bf16.mxu0 0
        %655 = vmatpush1.bf16.msra.mxu0 %v617
        %656 = vmatprep.subr.bf16.mxu0 0
        %657 = vmatpush1.bf16.msra.mxu0 %v618
        %658 = vmatprep.subr.bf16.mxu0 0
        %659 = vmatpush1.bf16.msra.mxu0 %v619
        %660 = vmatprep.subr.bf16.mxu0 0
        %661 = vmatpush1.bf16.msra.mxu0 %v620
        %662 = vmatprep.subr.bf16.mxu0 0
        %663 = vmatpush1.bf16.msra.mxu0 %v621
        %664 = vmatprep.subr.bf16.mxu0 0
        %665 = vmatpush1.bf16.msra.mxu0 %v622
        %666 = vmatprep.subr.bf16.mxu0 0
        %667 = vmatpush1.bf16.msra.mxu0 %v623
        %668 = vmatprep.subr.bf16.mxu0 0
        %669 = vmatpush1.bf16.msra.mxu0 %v624
        %670 = vmatprep.subr.bf16.mxu0 0
        %671 = vmatpush1.bf16.msra.mxu0 %v625
        %672 = vmatprep.subr.bf16.mxu0 0
        %673 = vmatpush1.bf16.msra.mxu0 %v626
        %674 = vmatprep.subr.bf16.mxu0 0
        %675 = vmatpush1.bf16.msra.mxu0 %v627
        %676 = vmatprep.mubr.bf16.mxu0 %v508
        %677 = vmatmul.mubr.bf16.gmra.mrb[0].mxu0 %v507
        %v678 = vpop.f32.mrb[0].mxu0
        %v679 = vadd.f32 %v546, %v678
        %v680 = vpop.f32.mrb[0].mxu0
        %v681 = vpop.f32.mrb[0].mxu0
        %v682 = vadd.f32 %v546, %v681
        %v683 = vpop.f32.mrb[0].mxu0
        %684 = vdwg.mxu0
        %v685 = vmax.f32 %v679, 0.0
        %v686 = vmax.f32 %v682, 0.0
        %v687 = vpack.c.bf16 %v686, %v685
        %v688 = vld [vmem:[#allocation8] sm:$0xf]
        %v689 = vld [vmem:[#allocation8 + $0x4] sm:$0xf]
        %v690 = vld [vmem:[#allocation8 + $0x8] sm:$0xf]
        %v691 = vld [vmem:[#allocation8 + $0xc] sm:$0xf]
        %v692 = vld [vmem:[#allocation8 + $0x10] sm:$0xf]
        %v693 = vld [vmem:[#allocation8 + $0x14] sm:$0xf]
        %v694 = vld [vmem:[#allocation8 + $0x18] sm:$0xf]
        %v695 = vld [vmem:[#allocation8 + $0x1c] sm:$0xf]
        %v696 = vld [vmem:[#allocation8 + $0x20] sm:$0xf]
        %v697 = vld [vmem:[#allocation8 + $0x24] sm:$0xf]
        %v698 = vld [vmem:[#allocation8 + $0x28] sm:$0xf]
        %v699 = vld [vmem:[#allocation8 + $0x2c] sm:$0xf]
        %v700 = vld [vmem:[#allocation8 + $0x30] sm:$0xf]
        %v701 = vld [vmem:[#allocation8 + $0x34] sm:$0xf]
        %v702 = vld [vmem:[#allocation8 + $0x38] sm:$0xf]
        %v703 = vld [vmem:[#allocation8 + $0x3c] sm:$0xf]
        %v704 = vld [vmem:[%s6] sm:$0x1]
        %v706 = vlaneseq
        %v707 = vshrl.u32 %v706, 7
        %v708 = vsub.s32 0, %v707
        %v709 = vrot.slane %v704, %v708
        %v727 = vunpack.c.l.b16 %v688
        %v728 = vunpack.c.l.b16 %v689
        %v729 = vunpack.c.l.b16 %v690
        %v730 = vunpack.c.l.b16 %v691
        %v731 = vunpack.c.l.b16 %v692
        %v732 = vunpack.c.l.b16 %v693
        %v733 = vunpack.c.l.b16 %v694
        %v734 = vunpack.c.l.b16 %v695
        %v735 = vunpack.c.l.b16 %v696
        %v736 = vunpack.c.l.b16 %v697
        %v737 = vunpack.c.l.b16 %v698
        %v738 = vunpack.c.l.b16 %v699
        %v739 = vunpack.c.l.b16 %v700
        %v740 = vunpack.c.l.b16 %v701
        %v741 = vunpack.c.l.b16 %v702
        %v742 = vunpack.c.l.b16 %v703
        %v743 = vpack.c.b16 %v728, %v727
        %v744 = vpack.c.b16 %v730, %v729
        %v745 = vpack.c.b16 %v732, %v731
        %v746 = vpack.c.b16 %v734, %v733
        %v747 = vpack.c.b16 %v736, %v735
        %v748 = vpack.c.b16 %v738, %v737
        %v749 = vpack.c.b16 %v740, %v739
        %v750 = vpack.c.b16 %v742, %v741
        %759 = vmatprep.subr.bf16.mxu0 0
        %760 = vmatpush1.bf16.msra.mxu0 %v743
        %761 = vmatprep.subr.bf16.mxu0 0
        %762 = vmatpush1.bf16.msra.mxu0 %v744
        %763 = vmatprep.subr.bf16.mxu0 0
        %764 = vmatpush1.bf16.msra.mxu0 %v745
        %765 = vmatprep.subr.bf16.mxu0 0
        %766 = vmatpush1.bf16.msra.mxu0 %v746
        %767 = vmatprep.subr.bf16.mxu0 0
        %768 = vmatpush1.bf16.msra.mxu0 %v747
        %769 = vmatprep.subr.bf16.mxu0 0
        %770 = vmatpush1.bf16.msra.mxu0 %v748
        %771 = vmatprep.subr.bf16.mxu0 0
        %772 = vmatpush1.bf16.msra.mxu0 %v749
        %773 = vmatprep.subr.bf16.mxu0 0
        %774 = vmatpush1.bf16.msra.mxu0 %v750
        %775 = vmatprep.subr.bf16.mxu0 0
        %776 = vmatpush1.bf16.msra.mxu0 0
        %777 = vmatprep.subr.bf16.mxu0 0
        %778 = vmatpush1.bf16.msra.mxu0 0
        %779 = vmatprep.subr.bf16.mxu0 0
        %780 = vmatpush1.bf16.msra.mxu0 0
        %781 = vmatprep.subr.bf16.mxu0 0
        %782 = vmatpush1.bf16.msra.mxu0 0
        %783 = vmatprep.subr.bf16.mxu0 0
        %784 = vmatpush1.bf16.msra.mxu0 0
        %785 = vmatprep.subr.bf16.mxu0 0
        %786 = vmatpush1.bf16.msra.mxu0 0
        %787 = vmatprep.subr.bf16.mxu0 0
        %788 = vmatpush1.bf16.msra.mxu0 0
        %789 = vmatprep.subr.bf16.mxu0 0
        %790 = vmatpush1.bf16.msra.mxu0 0
        %791 = vmatprep.mubr.bf16.mxu0 0
        %792 = vmatmul.mubr.bf16.gmra.mrb[0].mxu0 %v687
        %v793 = vpop.f32.mrb[0].mxu0
        %v794 = vadd.f32 %v709, %v793
        %v795 = vpop.f32.mrb[0].mxu0
        %v796 = vpop.f32.mrb[0].mxu0
        %v797 = vadd.f32 %v709, %v796
        %v798 = vpop.f32.mrb[0].mxu0
        %799 = vdwg.mxu0
        %v800 = vtanh.pop %v794
        %v801 = vtanh.pop %v797
        %802 = vst [vmem:[%s340] sm:$0xff] %v800
        %803 = vst [vmem:[%s340 + $0x8] sm:$0xff] %v801
        %s804 = sand.u32 %s186, 1
        %s805 = scalar_lea.sflag [#allocation4], %s804
        %s806 = sand.u32 %s186, 1
        %s807 = smul.addr %s806, 16
        %s808 = scalar_lea.vmem [#allocation10], %s807
        // Predicated region
        $region65: #{tpu_custom_call.1} parent=47 // pred_check
          %p809 = pneg %p196
        $region66: #{tpu_custom_call.1} parent=47 // pred_check_branch
          %811 = sbr.rel (%p809) target = $region68
        $region67: #{tpu_custom_call.1} parent=47 // pred_region
          %s812 = smul.u32 2, %s26
          %s814 = ssub.s32 256, 256
          %815 = vsyncadd %s805, %s814
          %s816 = smul.addr %s812, 128
          %s817 = scalar_lea.hbm %s7, %s816
          %s818 = sshll.u32 %s808, 4
          %s819 = int_to_ptr.vmem [resolvable:$true] %s818
          %824 = dma.vmem_to_hbm [thread:$0]  %s819, 256, %s817, %s805, 128, 128, 8
        $region68: #{tpu_custom_call.1} parent=47 // pred_fallthru
          _
      $region48: #{tpu_custom_call.1} parent=5 // pred_fallthru
        _
      %p825 = scmp.le.s32.totalorder 2, %s21
      // Predicated region
      $region69: #{tpu_custom_call.1} parent=5 // pred_check
        %p826 = pneg %p825
      $region70: #{tpu_custom_call.1} parent=5 // pred_check_branch
        %828 = sbr.rel (%p826) target = $region72
      $region71: #{tpu_custom_call.1} parent=5 // pred_region
        %s829 = ssub.s32 %s21, 2
        // Predicated region
        $region73: #{tpu_custom_call.1} parent=71 // pred_check
          %p830 = pneg %p202
        $region74: #{tpu_custom_call.1} parent=71 // pred_check_branch
          %832 = sbr.rel (%p830) target = $region76
        $region75: #{tpu_custom_call.1} parent=71 // pred_region
          %s833 = sand.u32 %s187, 1
          %s834 = scalar_lea.sflag [#allocation4], %s833
          %s835 = sand.u32 %s187, 1
          %s836 = smul.addr %s835, 16
          %s837 = scalar_lea.vmem [#allocation10], %s836
          %838 = dma.done %s834, 256
        $region76: #{tpu_custom_call.1} parent=71 // pred_fallthru
          _
      $region72: #{tpu_custom_call.1} parent=5 // pred_fallthru
        _
    $region6: #{tpu_custom_call.1} parent=1 // loop_footer
      %s25 = sadd.s32 1, %s21
    $region7: #{tpu_custom_call.1} parent=1 // loop_footer_branch
      %20 = sbr.rel target = $region3
    $region8: #{tpu_custom_call.1} parent=1 // loop_exit
      _
    %839 = vsyncpa [#allocation3], 1
    %s840 = scalar_lea.sflag [#allocation3], 1
    %841 = vsyncpa %s840, 1
    %842 = vsyncpa [#allocation6], 1
    %843 = vsyncpa [#allocation9], 1
    %844 = vsyncpa [#allocation4], 1
    %s845 = scalar_lea.sflag [#allocation4], 1
    %846 = vsyncpa %s845, 1

</llo_original>
